<compile_context>
chip_gen: v7x
topology: tpu7x:2x2x1
jax: 0.10.0
libtpu: 0.0.40
codegen_flags: <defaults>
</compile_context>

<pallas_src>
import jax
import jax.numpy as jnp
from jax.experimental import pallas as pl
from jax.experimental.pallas import tpu as pltpu


def _net_kernel(x_ref, w_ref, b_ref, o_ref):
    # Single fused linear: (B,10) @ (10,2) + (1,2)
    y = jnp.dot(x_ref[...], w_ref[...], preferred_element_type=jnp.float32)
    o_ref[...] = (y + b_ref[...]).astype(o_ref.dtype)


def net_forward(x, w1, b1, w2, b2):
    """x: (B, 10) f32; w1: (10, 10); b1: (1, 10); w2: (10, 2); b2: (1, 2).

    Computes fc1 followed by subnet.fc2 via an exact algebraic fusion of the
    two affine layers into a single matmul done inside the Pallas kernel.
    """
    # Exact fusion of the two affine layers (done once, outside the kernel).
    w = jnp.dot(w1, w2, preferred_element_type=jnp.float32)          # (10, 2)
    b = jnp.dot(b1, w2, preferred_element_type=jnp.float32) + b2     # (1, 2)

    B = x.shape[0]
    out_shape = jax.ShapeDtypeStruct((B, w.shape[1]), jnp.float32)

    vmem = pltpu.MemorySpace.VMEM
    # Gridless call: every operand is a full-array VMEM block; no pipeline
    # machinery, no per-step grid overhead.
    return pl.pallas_call(
        _net_kernel,
        out_shape=out_shape,
        in_specs=[
            pl.BlockSpec(memory_space=vmem),  # x   (B, 10)
            pl.BlockSpec(memory_space=vmem),  # w   (10, 2)
            pl.BlockSpec(memory_space=vmem),  # b   (1, 2)
        ],
        out_specs=pl.BlockSpec(memory_space=vmem),
    )(x, w, b)


if __name__ == "__main__":
    key = jax.random.PRNGKey(0)
    k_x, k_w1, k_b1, k_w2, k_b2 = jax.random.split(key, 5)

    B = 8          # small batch
    IN = 10        # fc1 in_features
    HID = 10       # fc1 out_features == fc2 in_features
    OUT = 2        # fc2 out_features

    # Deterministic synthetic parameters (PyTorch-style uniform init bounds).
    bound1 = 1.0 / jnp.sqrt(IN)
    bound2 = 1.0 / jnp.sqrt(HID)
    # Stored already transposed relative to PyTorch: (in, out).
    w1 = jax.random.uniform(k_w1, (IN, HID), jnp.float32, -bound1, bound1)
    b1 = jax.random.uniform(k_b1, (1, HID), jnp.float32, -bound1, bound1)
    w2 = jax.random.uniform(k_w2, (HID, OUT), jnp.float32, -bound2, bound2)
    b2 = jax.random.uniform(k_b2, (1, OUT), jnp.float32, -bound2, bound2)

    x = jax.random.normal(k_x, (B, IN), jnp.float32)

    out = net_forward(x, w1, b1, w2, b2)
    out = jax.block_until_ready(out)

    # Reference check in plain JAX (unfused two-layer path).
    ref = (x @ w1 + b1) @ w2 + b2
    assert out.shape == (B, OUT), out.shape
    assert jnp.allclose(out, ref, atol=1e-5, rtol=1e-5), "mismatch vs reference"

    print("KERNEL_OK")
</pallas_src>

<mosaic_0001>
module attributes {stable_mosaic.version = 11 : i64} {
  func.func @_net_kernel(%arg0: memref<8x10xf32, #tpu.memory_space<vmem>>, %arg1: memref<10x2xf32, #tpu.memory_space<vmem>>, %arg2: memref<1x2xf32, #tpu.memory_space<vmem>>, %arg3: memref<8x2xf32, #tpu.memory_space<vmem>>) attributes {dimension_semantics = [], scalar_prefetch = 0 : i64, scratch_operands = 0 : i64, tpu.core_type = #tpu.core_type<tc>} {
    %c0 = arith.constant 0 : index
    %c0_0 = arith.constant 0 : index
    %0 = vector.load %arg0[%c0, %c0_0] : memref<8x10xf32, #tpu.memory_space<vmem>>, vector<8x10xf32>
    %c0_1 = arith.constant 0 : index
    %c0_2 = arith.constant 0 : index
    %1 = vector.load %arg1[%c0_1, %c0_2] : memref<10x2xf32, #tpu.memory_space<vmem>>, vector<10x2xf32>
    %cst = arith.constant dense<0.000000e+00> : vector<8x2xf32>
    %2 = tpu.matmul %0, %1, %cst {dimension_numbers = #tpu.dot_dimension_numbers<[1], [0], [0], [1], [0, 0, 1, 1], [], []>} : vector<8x10xf32>, vector<10x2xf32>, vector<8x2xf32> -> vector<8x2xf32>
    %c0_3 = arith.constant 0 : index
    %c0_4 = arith.constant 0 : index
    %3 = vector.load %arg2[%c0_3, %c0_4] : memref<1x2xf32, #tpu.memory_space<vmem>>, vector<1x2xf32>
    %4 = vector.broadcast %3 : vector<1x2xf32> to vector<8x2xf32>
    %5 = arith.addf %2, %4 : vector<8x2xf32>
    %c0_5 = arith.constant 0 : index
    %c0_6 = arith.constant 0 : index
    %6 = vector.load %arg3[%c0_5, %c0_6] : memref<8x2xf32, #tpu.memory_space<vmem>>, vector<8x2xf32>
    tpu.vector_store %arg3[%c0_5, %c0_6], %5 {strides = array<i32>} : memref<8x2xf32, #tpu.memory_space<vmem>>, vector<8x2xf32>,
    return
  }
}

</mosaic_0001>

<llo_original>
// kernel: tpu_custom_call.1
$region0: #{tpu_custom_call.1}
  #allocation0 [shape = 'u32[]', space=smem, size = 0x4, offset = 0x4, fixed_abs, tag = 'smem constant byte address 0x4 - core index']
  #allocation1 [shape = 'u32[144,128]{1,0:T(1,128)}', space=vmem, size = 0x12000, scoped, tag = 'internal scratch']
  %s0 = inlined_call_operand.vmem [shape: f32[8,10], index: 0, kind: input, shape index: {}]
  %s1 = inlined_call_operand.vmem [shape: f32[10,2], index: 1, kind: input, shape index: {}]
  %s2 = inlined_call_operand.vmem [shape: f32[1,2], index: 2, kind: input, shape index: {}]
  %s3 = inlined_call_operand.vmem [shape: f32[8,2], index: 3, kind: output, shape index: {}]
  %s4 = sld [smem:[#allocation0]]
  $region22: #{tpu_custom_call.1} parent=0
    _
  %s6 = ssub.s32 1, %s4
  %s7 = scalar_select 0, %s6, %s4
  // Predicated region
  $region2: #{tpu_custom_call.1} parent=0 // pred_check
    _
  $region3: #{tpu_custom_call.1} parent=0 // pred_check_branch
    %9 = sbr.rel (0) target = $region5
  $region4: #{tpu_custom_call.1} parent=0 // pred_region
    _
  $region5: #{tpu_custom_call.1} parent=0 // pred_fallthru
    _
  // Predicated region
  $region6: #{tpu_custom_call.1} parent=0 // pred_check
    _
  $region7: #{tpu_custom_call.1} parent=0 // pred_check_branch
    %11 = sbr.rel (0) target = $region9
  $region8: #{tpu_custom_call.1} parent=0 // pred_region
    _
  $region9: #{tpu_custom_call.1} parent=0 // pred_fallthru
    _
  // Predicated region
  $region10: #{tpu_custom_call.1} parent=0 // pred_check
    _
  $region11: #{tpu_custom_call.1} parent=0 // pred_check_branch
    %13 = sbr.rel (0) target = $region13
  $region12: #{tpu_custom_call.1} parent=0 // pred_region
    _
  $region13: #{tpu_custom_call.1} parent=0 // pred_fallthru
    _
  %v14 = vld [vmem:[%s0] sm:$0xff]
  %v15 = vld [vmem:[%s1] sm:$0xff]
  %v16 = vld [vmem:[%s1 + $0x8] sm:$0x3]
  %v17 = vld [vmem:[%s2] sm:$0x1]
  %v19 = vlaneseq
  %v20 = vshrl.u32 %v19, 7
  %v21 = vsub.s32 0, %v20
  %v22 = vrot.slane %v17, %v21
  %vm24 = vcmask 80896
  %v26 = vsel %vm24, %v14, 0
  %vm28 = vcmask 1041408
  %v30 = vsel %vm28, %v16, 0
  %32 = vmatprep.subr.mxu0 0.0
  %33 = vmatpush1.msra.mxu0 %v15
  %34 = vmatprep.subr.mxu0 0.0
  %35 = vmatpush1.msra.mxu0 %v30
  %36 = vmatprep.subr.mxu0 0.0
  %37 = vmatpush1.msra.mxu0 0.0
  %38 = vmatprep.subr.mxu0 0.0
  %39 = vmatpush1.msra.mxu0 0.0
  %40 = vmatprep.subr.mxu0 0.0
  %41 = vmatpush1.msra.mxu0 0.0
  %42 = vmatprep.subr.mxu0 0.0
  %43 = vmatpush1.msra.mxu0 0.0
  %44 = vmatprep.subr.mxu0 0.0
  %45 = vmatpush1.msra.mxu0 0.0
  %46 = vmatprep.subr.mxu0 0.0
  %47 = vmatpush1.msra.mxu0 0.0
  %48 = vmatprep.subr.mxu0 0.0
  %49 = vmatpush1.msra.mxu0 0.0
  %50 = vmatprep.subr.mxu0 0.0
  %51 = vmatpush1.msra.mxu0 0.0
  %52 = vmatprep.subr.mxu0 0.0
  %53 = vmatpush1.msra.mxu0 0.0
  %54 = vmatprep.subr.mxu0 0.0
  %55 = vmatpush1.msra.mxu0 0.0
  %56 = vmatprep.subr.mxu0 0.0
  %57 = vmatpush1.msra.mxu0 0.0
  %58 = vmatprep.subr.mxu0 0.0
  %59 = vmatpush1.msra.mxu0 0.0
  %60 = vmatprep.subr.mxu0 0.0
  %61 = vmatpush1.msra.mxu0 0.0
  %62 = vmatprep.subr.mxu0 0.0
  %63 = vmatpush1.msra.mxu0 0.0
  %64 = vmatprep.subr.mxu0 0.0
  %65 = vmatpush1.msra.mxu0 0.0
  %66 = vmatprep.subr.mxu0 0.0
  %67 = vmatpush1.msra.mxu0 0.0
  %68 = vmatprep.subr.mxu0 0.0
  %69 = vmatpush1.msra.mxu0 0.0
  %70 = vmatprep.subr.mxu0 0.0
  %71 = vmatpush1.msra.mxu0 0.0
  %72 = vmatprep.subr.mxu0 0.0
  %73 = vmatpush1.msra.mxu0 0.0
  %74 = vmatprep.subr.mxu0 0.0
  %75 = vmatpush1.msra.mxu0 0.0
  %76 = vmatprep.subr.mxu0 0.0
  %77 = vmatpush1.msra.mxu0 0.0
  %78 = vmatprep.subr.mxu0 0.0
  %79 = vmatpush1.msra.mxu0 0.0
  %80 = vmatprep.subr.mxu0 0.0
  %81 = vmatpush1.msra.mxu0 0.0
  %82 = vmatprep.subr.mxu0 0.0
  %83 = vmatpush1.msra.mxu0 0.0
  %84 = vmatprep.subr.mxu0 0.0
  %85 = vmatpush1.msra.mxu0 0.0
  %86 = vmatprep.subr.mxu0 0.0
  %87 = vmatpush1.msra.mxu0 0.0
  %88 = vmatprep.subr.mxu0 0.0
  %89 = vmatpush1.msra.mxu0 0.0
  %90 = vmatprep.subr.mxu0 0.0
  %91 = vmatpush1.msra.mxu0 0.0
  %92 = vmatprep.subr.mxu0 0.0
  %93 = vmatpush1.msra.mxu0 0.0
  %94 = vmatprep.subr.mxu0 0.0
  %95 = vmatpush1.msra.mxu0 0.0
  %96 = vmatprep.mubr.f32.mxu0 0.0
  %97 = vmatmul.mubr.f32.gmra.mrb[0].mxu0 %v26
  %v98 = vpop.f32.mrb[0].mxu0
  %v99 = vadd.f32 %v22, %v98
  %v100 = vpop.f32.mrb[0].mxu0
  %101 = vdwg.mxu0
  %vm102 = vcmask 15360
  %103 = vst.msk [vmem:[%s3] sm:$0xff] %vm102, %v99
  // Predicated region
  $region14: #{tpu_custom_call.1} parent=0 // pred_check
    _
  $region15: #{tpu_custom_call.1} parent=0 // pred_check_branch
    %105 = sbr.rel (0) target = $region17
  $region16: #{tpu_custom_call.1} parent=0 // pred_region
    _
  $region17: #{tpu_custom_call.1} parent=0 // pred_fallthru
    _
  // Predicated region
  $region18: #{tpu_custom_call.1} parent=0 // pred_check
    _
  $region19: #{tpu_custom_call.1} parent=0 // pred_check_branch
    %107 = sbr.rel (0) target = $region21
  $region20: #{tpu_custom_call.1} parent=0 // pred_region
    _
  $region21: #{tpu_custom_call.1} parent=0 // pred_fallthru
    _

</llo_original>
